<compile_context>
chip_gen: v7x
topology: tpu7x:2x2x1
jax: 0.10.0
libtpu: 0.0.40
codegen_flags: <defaults>
</compile_context>

<pallas_src>
from functools import partial

import jax
import jax.numpy as jnp
from jax import lax
from jax.experimental import pallas as pl
from jax.experimental.pallas import tpu as pltpu


def _style_loss_kernel(x_ref, t_ref, sq_ref, ab_ref, gram_acc, *, hw):
    """One (batch b, HW-tile k) grid step.

    x_ref    : (1, C, TK)  feature-map tile for batch element b (native dtype)
    t_ref    : (1, C, C)   target Gram matrix for batch b (resident across k)
    sq_ref   : (1, 1, 1)   per-batch sum(diff^2) output
    ab_ref   : (1, 1, 1)   per-batch sum(|diff|) output
    gram_acc : (C, C) f32  Gram accumulator scratch, persists across k steps
    """
    k = pl.program_id(1)

    @pl.when(k == 0)
    def _():
        gram_acc[...] = jnp.zeros_like(gram_acc)

    x = x_ref[0]  # (C, TK)
    # Contract directly over the lane (HW) axis: x @ x.T without materializing
    # the transpose.  MXU matmul with f32 accumulation.
    gram_acc[...] += lax.dot_general(
        x, x,
        dimension_numbers=(((1,), (1,)), ((), ())),
        preferred_element_type=jnp.float32,
    )

    @pl.when(k == pl.num_programs(1) - 1)
    def _():
        gram = gram_acc[...] * (1.0 / hw)
        diff = gram - t_ref[0].astype(jnp.float32)  # (C, C)
        sq_ref[...] = jnp.reshape(jnp.sum(diff * diff), (1, 1, 1))
        ab_ref[...] = jnp.reshape(jnp.sum(jnp.abs(diff)), (1, 1, 1))


def _choose_tile(hw, c, itemsize, vmem_budget_bytes=8 * 1024 * 1024,
                 max_tk=16384):
    """Pick the HW tile width (multiple of 128 or the full extent).

    Returns (tk, padded_hw).  The budget covers the double-buffered x tile
    (2 * C * tk * itemsize); the cap keeps single grid steps reasonable.
    """
    cap = vmem_budget_bytes // (2 * c * itemsize)
    cap = max(128, (cap // 128) * 128)
    cap = min(cap, max_tk)
    if hw <= cap:
        # Single tile == full extent (always a legal block shape).
        return hw, hw
    # Balance the tiles: n_k tiles of width tk (multiple of 128), minimal pad.
    n_k = pl.cdiv(hw, cap)
    tk = ((pl.cdiv(hw, n_k) + 127) // 128) * 128
    return tk, n_k * tk


def style_loss(x, target, eps=1e-8):
    """x: (B, C, H, W) features, target: (B, C, C) Gram target -> scalar f32."""
    B, C, H, W = x.shape
    HW = H * W
    mat = x.reshape(B, C, HW)          # stream the native dtype
    target = target.astype(jnp.float32)

    itemsize = jnp.dtype(mat.dtype).itemsize
    tk, hw_pad = _choose_tile(HW, C, itemsize)
    if hw_pad != HW:
        # Zero columns contribute nothing to x @ x.T; we still divide by the
        # original HW, so the result is unchanged.
        mat = jnp.pad(mat, ((0, 0), (0, 0), (0, hw_pad - HW)))
    n_k = hw_pad // tk

    cost = pl.CostEstimate(
        flops=2 * B * C * C * HW,
        transcendentals=0,
        bytes_accessed=B * C * HW * itemsize + B * C * C * 4 + 2 * B * 4,
    )

    sq, ab = pl.pallas_call(
        partial(_style_loss_kernel, hw=float(HW)),
        out_shape=(
            jax.ShapeDtypeStruct((B, 1, 1), jnp.float32),
            jax.ShapeDtypeStruct((B, 1, 1), jnp.float32),
        ),
        grid_spec=pltpu.PrefetchScalarGridSpec(
            num_scalar_prefetch=0,
            grid=(B, n_k),
            in_specs=[
                pl.BlockSpec((1, C, tk), lambda b, k: (b, 0, k)),
                # Block index independent of k -> target stays resident across
                # all HW tiles of a given batch element.
                pl.BlockSpec((1, C, C), lambda b, k: (b, 0, 0)),
            ],
            out_specs=[
                pl.BlockSpec((1, 1, 1), lambda b, k: (b, 0, 0)),
                pl.BlockSpec((1, 1, 1), lambda b, k: (b, 0, 0)),
            ],
            scratch_shapes=[pltpu.VMEM((C, C), jnp.float32)],
        ),
        compiler_params=pltpu.CompilerParams(
            dimension_semantics=("parallel", "arbitrary"),
        ),
        cost_estimate=cost,
    )(mat, target)

    # Tiny final reduction + ScaledMSE division in plain JAX.
    return jnp.sum(sq) / (jnp.sum(ab) + eps)


def _get_target_gram(feats):
    """Plain-JAX equivalent of StyleLoss.get_target (builds the target buffer)."""
    B, C, H, W = feats.shape
    mat = feats.reshape(B, C, H * W)
    return jnp.einsum("bik,bjk->bij", mat, mat) / (H * W)


def _reference_loss(x, target, eps=1e-8):
    gram = _get_target_gram(x)
    diff = gram - target
    return jnp.sum(diff ** 2) / (jnp.sum(jnp.abs(diff)) + eps)


if __name__ == "__main__":
    key = jax.random.PRNGKey(0)
    k_in, k_tgt = jax.random.split(key)

    B, C, H, W = 2, 4, 16, 16
    x = jax.random.normal(k_in, (B, C, H, W), dtype=jnp.float32)

    # Deterministic "target" buffer: Gram matrix of other random features
    # (what StyleLoss.__init__ would register from the style-image pass).
    target_feats = jax.random.normal(k_tgt, (B, C, H, W), dtype=jnp.float32)
    target = _get_target_gram(target_feats)

    loss = style_loss(x, target)
    loss = jax.block_until_ready(loss)

    ref = jax.block_until_ready(_reference_loss(x, target))
    assert jnp.allclose(loss, ref, rtol=1e-5, atol=1e-5), (loss, ref)

    print("KERNEL_OK")
</pallas_src>

<mosaic_0001>
module attributes {stable_mosaic.version = 11 : i64} {
  func.func @_style_loss_kernel(%arg0: i32, %arg1: i32, %arg2: memref<1x4x256xf32, #tpu.memory_space<vmem>>, %arg3: memref<1x4x4xf32, #tpu.memory_space<vmem>>, %arg4: memref<1x1x1xf32, #tpu.memory_space<vmem>>, %arg5: memref<1x1x1xf32, #tpu.memory_space<vmem>>, %arg6: memref<4x4xf32, #tpu.memory_space<vmem>>) attributes {dimension_semantics = [#tpu.dimension_semantics<parallel>, #tpu.dimension_semantics<arbitrary>], iteration_bounds = array<i64: 2, 1>, scalar_prefetch = 0 : i64, scratch_operands = 1 : i64, tpu.core_type = #tpu.core_type<tc>, window_params = [{transform_indices = @transform_0, window_bounds = array<i64: 1, 4, 256>}, {transform_indices = @transform_1, window_bounds = array<i64: 1, 4, 4>}, {transform_indices = @transform_2, window_bounds = array<i64: 1, 1, 1>}, {transform_indices = @transform_3, window_bounds = array<i64: 1, 1, 1>}]} {
    %c0_i32 = arith.constant 0 : i32
    %0 = arith.cmpi eq, %arg1, %c0_i32 : i32
    %1 = arith.extui %0 : i1 to i32
    %c0_i32_0 = arith.constant 0 : i32
    %2 = arith.cmpi ne, %1, %c0_i32_0 : i32
    scf.if %2 {
      %cst_9 = arith.constant 0.000000e+00 : f32
      %12 = vector.broadcast %cst_9 : f32 to vector<4x4xf32>
      %c0_10 = arith.constant 0 : index
      %c0_11 = arith.constant 0 : index
      %13 = vector.load %arg6[%c0_10, %c0_11] : memref<4x4xf32, #tpu.memory_space<vmem>>, vector<4x4xf32>
      tpu.vector_store %arg6[%c0_10, %c0_11], %12 {strides = array<i32>} : memref<4x4xf32, #tpu.memory_space<vmem>>, vector<4x4xf32>,
    } else {
    }
    %c0 = arith.constant 0 : index
    %c0_1 = arith.constant 0 : index
    %c0_2 = arith.constant 0 : index
    %3 = vector.load %arg2[%c0, %c0_1, %c0_2] : memref<1x4x256xf32, #tpu.memory_space<vmem>>, vector<1x4x256xf32>
    %4 = vector.shape_cast %3 : vector<1x4x256xf32> to vector<4x256xf32>
    %c0_3 = arith.constant 0 : index
    %c0_4 = arith.constant 0 : index
    %5 = vector.load %arg6[%c0_3, %c0_4] : memref<4x4xf32, #tpu.memory_space<vmem>>, vector<4x4xf32>
    %cst = arith.constant dense<0.000000e+00> : vector<4x4xf32>
    %6 = tpu.matmul %4, %4, %cst {dimension_numbers = #tpu.dot_dimension_numbers<[1], [1], [0], [0], [0, 0, 1, 0], [], []>} : vector<4x256xf32>, vector<4x256xf32>, vector<4x4xf32> -> vector<4x4xf32>
    %7 = arith.addf %5, %6 : vector<4x4xf32>
    %c0_5 = arith.constant 0 : index
    %c0_6 = arith.constant 0 : index
    %8 = vector.load %arg6[%c0_5, %c0_6] : memref<4x4xf32, #tpu.memory_space<vmem>>, vector<4x4xf32>
    tpu.vector_store %arg6[%c0_5, %c0_6], %7 {strides = array<i32>} : memref<4x4xf32, #tpu.memory_space<vmem>>, vector<4x4xf32>,
    %c0_i32_7 = arith.constant 0 : i32
    %9 = arith.cmpi eq, %arg1, %c0_i32_7 : i32
    %10 = arith.extui %9 : i1 to i32
    %c0_i32_8 = arith.constant 0 : i32
    %11 = arith.cmpi ne, %10, %c0_i32_8 : i32
    scf.if %11 {
      %c0_9 = arith.constant 0 : index
      %c0_10 = arith.constant 0 : index
      %12 = vector.load %arg6[%c0_9, %c0_10] : memref<4x4xf32, #tpu.memory_space<vmem>>, vector<4x4xf32>
      %cst_11 = arith.constant 3.906250e-03 : f32
      %13 = vector.broadcast %cst_11 : f32 to vector<4x4xf32>
      %14 = arith.mulf %12, %13 : vector<4x4xf32>
      %c0_12 = arith.constant 0 : index
      %c0_13 = arith.constant 0 : index
      %c0_14 = arith.constant 0 : index
      %15 = vector.load %arg3[%c0_12, %c0_13, %c0_14] : memref<1x4x4xf32, #tpu.memory_space<vmem>>, vector<1x4x4xf32>
      %16 = vector.shape_cast %15 : vector<1x4x4xf32> to vector<4x4xf32>
      %17 = arith.subf %14, %16 : vector<4x4xf32>
      %18 = arith.mulf %17, %17 : vector<4x4xf32>
      %19 = vector.shape_cast %18 : vector<4x4xf32> to vector<1x4x4xf32>
      %cst_15 = arith.constant dense<0.000000e+00> : vector<1xf32>
      %20 = vector.multi_reduction <add>, %19, %cst_15 [1, 2] : vector<1x4x4xf32> to vector<1xf32>
      %21 = vector.shape_cast %20 : vector<1xf32> to vector<1x1x1xf32>
      %22 = vector.extract %21[0, 0, 0] : f32 from vector<1x1x1xf32>
      %23 = vector.broadcast %22 : f32 to vector<1x1x1xf32>
      %c0_16 = arith.constant 0 : index
      %c0_17 = arith.constant 0 : index
      %c0_18 = arith.constant 0 : index
      %24 = vector.load %arg4[%c0_16, %c0_17, %c0_18] : memref<1x1x1xf32, #tpu.memory_space<vmem>>, vector<1x1x1xf32>
      tpu.vector_store %arg4[%c0_16, %c0_17, %c0_18], %23 {strides = array<i32>} : memref<1x1x1xf32, #tpu.memory_space<vmem>>, vector<1x1x1xf32>,
      %25 = math.absf %17 : vector<4x4xf32>
      %26 = vector.shape_cast %25 : vector<4x4xf32> to vector<1x4x4xf32>
      %cst_19 = arith.constant dense<0.000000e+00> : vector<1xf32>
      %27 = vector.multi_reduction <add>, %26, %cst_19 [1, 2] : vector<1x4x4xf32> to vector<1xf32>
      %28 = vector.shape_cast %27 : vector<1xf32> to vector<1x1x1xf32>
      %29 = vector.extract %28[0, 0, 0] : f32 from vector<1x1x1xf32>
      %30 = vector.broadcast %29 : f32 to vector<1x1x1xf32>
      %c0_20 = arith.constant 0 : index
      %c0_21 = arith.constant 0 : index
      %c0_22 = arith.constant 0 : index
      %31 = vector.load %arg5[%c0_20, %c0_21, %c0_22] : memref<1x1x1xf32, #tpu.memory_space<vmem>>, vector<1x1x1xf32>
      tpu.vector_store %arg5[%c0_20, %c0_21, %c0_22], %30 {strides = array<i32>} : memref<1x1x1xf32, #tpu.memory_space<vmem>>, vector<1x1x1xf32>,
    } else {
    }
    return
  }
  func.func @transform_0(%arg0: i32, %arg1: i32) -> (i32, i32, i32) {
    %c0_i32 = arith.constant 0 : i32
    %c0_i32_0 = arith.constant 0 : i32
    return %arg0, %c0_i32, %arg1 : i32, i32, i32
  }
  func.func @transform_1(%arg0: i32, %arg1: i32) -> (i32, i32, i32) {
    %c0_i32 = arith.constant 0 : i32
    %c0_i32_0 = arith.constant 0 : i32
    %c0_i32_1 = arith.constant 0 : i32
    return %arg0, %c0_i32, %c0_i32_0 : i32, i32, i32
  }
  func.func @transform_2(%arg0: i32, %arg1: i32) -> (i32, i32, i32) {
    %c0_i32 = arith.constant 0 : i32
    %c0_i32_0 = arith.constant 0 : i32
    %c0_i32_1 = arith.constant 0 : i32
    return %arg0, %c0_i32, %c0_i32_0 : i32, i32, i32
  }
  func.func @transform_3(%arg0: i32, %arg1: i32) -> (i32, i32, i32) {
    %c0_i32 = arith.constant 0 : i32
    %c0_i32_0 = arith.constant 0 : i32
    %c0_i32_1 = arith.constant 0 : i32
    return %arg0, %c0_i32, %c0_i32_0 : i32, i32, i32
  }
}

</mosaic_0001>

<llo_original>
// kernel: tpu_custom_call.1
$region0: #{tpu_custom_call.1}
  #allocation0 [shape = 'u32[]', space=smem, size = 0x4, offset = 0x4, fixed_abs, tag = 'smem constant byte address 0x4 - core index']
  #allocation1 [shape = 'u32[144,128]{1,0:T(1,128)}', space=vmem, size = 0x12000, scoped, tag = 'internal scratch']
  #allocation2 [shape = 'f32[4,4]{1,0:T(4,128)}', space=vmem, size = 0x800, scoped, tag = 'scratch operand']
  %s0 = inlined_call_operand.hbm [shape: f32[2,4,256], index: 0, kind: input, shape index: {}]
  %s1 = inlined_call_operand.hbm [shape: f32[2,4,4], index: 1, kind: input, shape index: {}]
  %s2 = inlined_call_operand.vmem [shape: f32[2,1,1], index: 2, kind: output, shape index: {0}]
  %s3 = inlined_call_operand.vmem [shape: f32[2,1,1], index: 3, kind: output, shape index: {1}]
  %4 = xla_tuple %s2, %s3
  %s5 = sld [smem:[#allocation0]]
  $region65: #{tpu_custom_call.1} parent=0
    _
  %s7 = ssub.s32 1, %s5
  %s8 = scalar_select 0, %s7, %s5
  $region1: #{tpu_custom_call.1} parent=0
    #allocation3 [shape = 'u8[8192]{0}', space=vmem, size = 0x2000, scoped, tag = 'input window, operand 0']
    #allocation4 [shape = 's32[2]{0}', space=sflag, size = 0x8, scoped, tag = 'scoped memory for tpu_custom_call.1']
    #allocation5 [shape = 'u8[4096]{0}', space=vmem, size = 0x1000, scoped, tag = 'input window, operand 1']
    #allocation6 [shape = 's32[2]{0}', space=sflag, size = 0x8, scoped, tag = 'scoped memory for tpu_custom_call.1']
    %9 = vsyncpa [#allocation4], 0
    %s10 = scalar_lea.sflag [#allocation4], 1
    %11 = vsyncpa %s10, 0
    %12 = vsyncpa [#allocation6], 0
    %s13 = scalar_lea.sflag [#allocation6], 1
    %14 = vsyncpa %s13, 0
    loop: start=0, step=1, limit=4
    $region2: #{tpu_custom_call.1} parent=1 // loop_pre_header
      _
    $region3: #{tpu_custom_call.1} parent=1 // loop_header
      %s16 = sphi 0, %s20
      %p17 = scmp.ge.s32.totalorder %s16, 4
      %s23 = sphi 0, %s35
      %s24 = sphi 0, %s31
      %s25 = sphi 0, %s23
      %s26 = sphi 0, %s24
      %s27 = sphi 0, %s25
      %s28 = sphi 0, %s26
      %s40 = sphi 0, %s42
      %s43 = sphi 0, %s40
      %s44 = sphi 0, %s43
      %s60 = sphi 0, %s44
      %s66 = sphi 0, %s68
      %s69 = sphi 0, %s66
      %s70 = sphi 0, %s69
      %s86 = sphi 0, %s70
      %s92 = sphi 0, %s94
      %s95 = sphi 0, %s92
      %s96 = sphi 0, %s95
      %s112 = sphi 0, %s96
      %s118 = sphi 0, %s120
      %s121 = sphi 0, %s118
      %s122 = sphi 0, %s121
      %s138 = sphi 0, %s122
    $region4: #{tpu_custom_call.1} parent=1 // loop_header_branch
      %19 = sbr.rel (%p17) target = $region8
    $region5: #{tpu_custom_call.1} parent=1 // loop_body
      %s21 = ssub.s32 %s16, 1
      %s22 = ssub.s32 %s16, 2
      %s29 = sadd.s32 1, %s24
      %p30 = scmp.ge.s32.totalorder %s29, 1
      %s31 = scalar_select %p30, 0, %s29
      %s32 = sadd.s32 1, %s23
      %s33 = scalar_select %p30, %s32, %s23
      %p34 = scmp.ge.s32.totalorder %s33, 2
      %s35 = scalar_select %p34, 0, %s33
      %s36 = ssub.s32 %s23, %s35
      %s37 = ssub.s32 %s24, %s31
      %s38 = sor.u32 %s36, %s37
      %p39 = scmp.eq.s32.totalorder %s38, 0
      %s41 = sadd.s32 %s40, 1
      %s42 = scalar_select %p39, %s40, %s41
      %p45 = pneg %p39
      %p46 = scmp.eq.s32.totalorder %s16, 1
      %p47 = por %p45, %p46
      %p48 = scmp.ne.s32.totalorder %s40, %s43
      %p49 = scmp.eq.s32.totalorder %s16, 0
      %p50 = por %p48, %p49
      %p51 = scmp.ne.s32.totalorder %s40, %s43
      %p52 = scmp.eq.s32.totalorder %s21, 1
      %p53 = por %p51, %p52
      %p54 = scmp.ne.s32.totalorder %s43, %s44
      %p55 = scmp.eq.s32.totalorder %s21, 0
      %p56 = por %p54, %p55
      %p57 = scmp.ne.s32.totalorder %s43, %s44
      %p58 = scmp.eq.s32.totalorder %s22, 1
      %p59 = por %p57, %p58
      %p61 = scmp.ne.s32.totalorder %s44, %s60
      %p62 = scmp.eq.s32.totalorder %s22, 0
      %p63 = por %p61, %p62
      %s64 = ssub.s32 %s23, %s35
      %p65 = scmp.eq.s32.totalorder %s64, 0
      %s67 = sadd.s32 %s66, 1
      %s68 = scalar_select %p65, %s66, %s67
      %p71 = pneg %p65
      %p72 = scmp.eq.s32.totalorder %s16, 1
      %p73 = por %p71, %p72
      %p74 = scmp.ne.s32.totalorder %s66, %s69
      %p75 = scmp.eq.s32.totalorder %s16, 0
      %p76 = por %p74, %p75
      %p77 = scmp.ne.s32.totalorder %s66, %s69
      %p78 = scmp.eq.s32.totalorder %s21, 1
      %p79 = por %p77, %p78
      %p80 = scmp.ne.s32.totalorder %s69, %s70
      %p81 = scmp.eq.s32.totalorder %s21, 0
      %p82 = por %p80, %p81
      %p83 = scmp.ne.s32.totalorder %s69, %s70
      %p84 = scmp.eq.s32.totalorder %s22, 1
      %p85 = por %p83, %p84
      %p87 = scmp.ne.s32.totalorder %s70, %s86
      %p88 = scmp.eq.s32.totalorder %s22, 0
      %p89 = por %p87, %p88
      %s90 = ssub.s32 %s23, %s35
      %p91 = scmp.eq.s32.totalorder %s90, 0
      %s93 = sadd.s32 %s92, 1
      %s94 = scalar_select %p91, %s92, %s93
      %p97 = pneg %p91
      %p98 = scmp.eq.s32.totalorder %s16, 1
      %p99 = por %p97, %p98
      %p100 = scmp.ne.s32.totalorder %s92, %s95
      %p101 = scmp.eq.s32.totalorder %s16, 0
      %p102 = por %p100, %p101
      %p103 = scmp.ne.s32.totalorder %s92, %s95
      %p104 = scmp.eq.s32.totalorder %s21, 1
      %p105 = por %p103, %p104
      %p106 = scmp.ne.s32.totalorder %s95, %s96
      %p107 = scmp.eq.s32.totalorder %s21, 0
      %p108 = por %p106, %p107
      %p109 = scmp.ne.s32.totalorder %s95, %s96
      %p110 = scmp.eq.s32.totalorder %s22, 1
      %p111 = por %p109, %p110
      %p113 = scmp.ne.s32.totalorder %s96, %s112
      %p114 = scmp.eq.s32.totalorder %s22, 0
      %p115 = por %p113, %p114
      %s116 = ssub.s32 %s23, %s35
      %p117 = scmp.eq.s32.totalorder %s116, 0
      %s119 = sadd.s32 %s118, 1
      %s120 = scalar_select %p117, %s118, %s119
      %p123 = pneg %p117
      %p124 = scmp.eq.s32.totalorder %s16, 1
      %p125 = por %p123, %p124
      %p126 = scmp.ne.s32.totalorder %s118, %s121
      %p127 = scmp.eq.s32.totalorder %s16, 0
      %p128 = por %p126, %p127
      %p129 = scmp.ne.s32.totalorder %s118, %s121
      %p130 = scmp.eq.s32.totalorder %s21, 1
      %p131 = por %p129, %p130
      %p132 = scmp.ne.s32.totalorder %s121, %s122
      %p133 = scmp.eq.s32.totalorder %s21, 0
      %p134 = por %p132, %p133
      %p135 = scmp.ne.s32.totalorder %s121, %s122
      %p136 = scmp.eq.s32.totalorder %s22, 1
      %p137 = por %p135, %p136
      %p139 = scmp.ne.s32.totalorder %s122, %s138
      %p140 = scmp.eq.s32.totalorder %s22, 0
      %p141 = por %p139, %p140
      %p142 = scmp.le.s32.totalorder 1, %s16
      %p143 = scmp.lt.s32.totalorder %s16, 3
      %p144 = pnand %p142, %p143
      %p145 = pneg %p144
      // Predicated region
      $region9: #{tpu_custom_call.1} parent=5 // pred_check
        _
      $region10: #{tpu_custom_call.1} parent=5 // pred_check_branch
        %147 = sbr.rel (%p144) target = $region12
      $region11: #{tpu_custom_call.1} parent=5 // pred_region
        %s148 = ssub.s32 %s16, 1
      $region12: #{tpu_custom_call.1} parent=5 // pred_fallthru
        _
      %p149 = scmp.lt.s32.totalorder %s16, 2
      // Predicated region
      $region13: #{tpu_custom_call.1} parent=5 // pred_check
        %p150 = pneg %p149
      $region14: #{tpu_custom_call.1} parent=5 // pred_check_branch
        %152 = sbr.rel (%p150) target = $region16
      $region15: #{tpu_custom_call.1} parent=5 // pred_region
        // Predicated region
        $region17: #{tpu_custom_call.1} parent=15 // pred_check
          %p153 = pneg %p50
        $region18: #{tpu_custom_call.1} parent=15 // pred_check_branch
          %155 = sbr.rel (%p153) target = $region20
        $region19: #{tpu_custom_call.1} parent=15 // pred_region
          %s156 = sand.u32 %s40, 1
          %s157 = scalar_lea.sflag [#allocation4], %s156
          %s158 = sand.u32 %s40, 1
          %s159 = smul.addr %s158, 8
          %s160 = scalar_lea.vmem [#allocation3], %s159
          %s161 = smul.u32 2, %s24
          %s163 = ssub.s32 128, 128
          %164 = vsyncadd %s157, %s163
          %s165 = smul.addr %s23, 2
          %s166 = sadd.s32 %s161, %s165
          %s167 = smul.addr %s166, 64
          %s168 = scalar_lea.hbm %s0, %s167
          %s170 = sshll.u32 %s160, 4
          %s171 = int_to_ptr.vmem [resolvable:$true] %s170
          %173 = dma.hbm_to_vmem [thread:$0]  %s168, 128, %s171, %s157
        $region20: #{tpu_custom_call.1} parent=15 // pred_fallthru
          _
        // Predicated region
        $region21: #{tpu_custom_call.1} parent=15 // pred_check
          %p174 = pneg %p76
        $region22: #{tpu_custom_call.1} parent=15 // pred_check_branch
          %176 = sbr.rel (%p174) target = $region24
        $region23: #{tpu_custom_call.1} parent=15 // pred_region
          %s177 = sand.u32 %s66, 1
          %s178 = scalar_lea.sflag [#allocation6], %s177
          %s179 = sand.u32 %s66, 1
          %s180 = smul.addr %s179, 4
          %s181 = scalar_lea.vmem [#allocation5], %s180
          %s183 = ssub.s32 64, 64
          %184 = vsyncadd %s178, %s183
          %s185 = smul.addr %s23, 64
          %s186 = scalar_lea.hbm %s1, %s185
          %s188 = sshll.u32 %s181, 4
          %s189 = int_to_ptr.vmem [resolvable:$true] %s188
          %191 = dma.hbm_to_vmem [thread:$0]  %s186, 64, %s189, %s178
        $region24: #{tpu_custom_call.1} parent=15 // pred_fallthru
          _
      $region16: #{tpu_custom_call.1} parent=5 // pred_fallthru
        _
      %p192 = scmp.le.s32.totalorder 1, %s16
      %p193 = scmp.lt.s32.totalorder %s16, 3
      %p194 = pnand %p192, %p193
      %p195 = pneg %p194
      // Predicated region
      $region25: #{tpu_custom_call.1} parent=5 // pred_check
        _
      $region26: #{tpu_custom_call.1} parent=5 // pred_check_branch
        %197 = sbr.rel (%p194) target = $region28
      $region27: #{tpu_custom_call.1} parent=5 // pred_region
        %s198 = ssub.s32 %s16, 1
        %s199 = sand.u32 %s43, 1
        %s200 = scalar_lea.sflag [#allocation4], %s199
        %s201 = sand.u32 %s43, 1
        %s202 = smul.addr %s201, 8
        %s203 = scalar_lea.vmem [#allocation3], %s202
        // Predicated region
        $region29: #{tpu_custom_call.1} parent=27 // pred_check
          %p204 = pneg %p56
        $region30: #{tpu_custom_call.1} parent=27 // pred_check_branch
          %206 = sbr.rel (%p204) target = $region32
        $region31: #{tpu_custom_call.1} parent=27 // pred_region
          %207 = dma.done %s200, 128
        $region32: #{tpu_custom_call.1} parent=27 // pred_fallthru
          _
        %s208 = sand.u32 %s69, 1
        %s209 = scalar_lea.sflag [#allocation6], %s208
        %s210 = sand.u32 %s69, 1
        %s211 = smul.addr %s210, 4
        %s212 = scalar_lea.vmem [#allocation5], %s211
        // Predicated region
        $region33: #{tpu_custom_call.1} parent=27 // pred_check
          %p213 = pneg %p82
        $region34: #{tpu_custom_call.1} parent=27 // pred_check_branch
          %215 = sbr.rel (%p213) target = $region36
        $region35: #{tpu_custom_call.1} parent=27 // pred_region
          %216 = dma.done %s209, 64
        $region36: #{tpu_custom_call.1} parent=27 // pred_fallthru
          _
        %s217 = sand.u32 %s43, 1
        %s218 = scalar_lea.sflag [#allocation4], %s217
        %s219 = sand.u32 %s43, 1
        %s220 = smul.addr %s219, 8
        %s221 = scalar_lea.vmem [#allocation3], %s220
        %p222 = pneg %p56
        %p223 = pneg %p53
        %s224 = sand.u32 %s69, 1
        %s225 = scalar_lea.sflag [#allocation6], %s224
        %s226 = sand.u32 %s69, 1
        %s227 = smul.addr %s226, 4
        %s228 = scalar_lea.vmem [#allocation5], %s227
        %p229 = pneg %p82
        %p230 = pneg %p79
        %p231 = pneg %p108
        %p232 = pneg %p105
        %p233 = scmp.lt.s32.totalorder %s25, 1
        %s234 = scalar_select %p233, %s25, 1
        %s235 = scalar_lea.vmem %s2, %s234
        %p236 = pneg %p134
        %p237 = pneg %p131
        %p238 = scmp.lt.s32.totalorder %s25, 1
        %s239 = scalar_select %p238, %s25, 1
        %s240 = scalar_lea.vmem %s3, %s239
        %s241 = smul.u32 2, %s26
        %p242 = scmp.lt.s32.totalorder %s25, 1
        %s243 = scalar_select %p242, %s25, 1
        %s244 = scalar_lea.vmem %s2, %s243
        %p245 = scmp.lt.s32.totalorder %s25, 1
        %s246 = scalar_select %p245, %s25, 1
        %s247 = scalar_lea.vmem %s3, %s246
        %p248 = scmp.eq.s32.totalorder %s26, 0
        // Predicated region
        $region37: #{tpu_custom_call.1} parent=27 // pred_check
          %p249 = pneg %p248
        $region38: #{tpu_custom_call.1} parent=27 // pred_check_branch
          %251 = sbr.rel (%p249) target = $region40
        $region39: #{tpu_custom_call.1} parent=27 // pred_region
          %vm252 = vcmask 27648
          %253 = vst.msk [vmem:[#allocation2] sm:$0xf] %vm252, 0.0
        $region40: #{tpu_custom_call.1} parent=27 // pred_fallthru
          _
        %v254 = vld [vmem:[%s203] sm:$0xff]
        %v255 = vld [vmem:[#allocation2] sm:$0xf]
        %v257 = vcombine.high %v254, %v254
        %259 = vmatprep.subr.mxu0 %v257
        %260 = vmatpush1.xpose.msra.mxu0 %v254
        %261 = vmatprep.subr.mxu0 0.0
        %262 = vmatpush1.xpose.msra.mxu0 0.0
        %263 = vmatprep.subr.mxu0 0.0
        %264 = vmatpush1.xpose.msra.mxu0 0.0
        %265 = vmatprep.subr.mxu0 0.0
        %266 = vmatpush1.xpose.msra.mxu0 0.0
        %267 = vmatprep.subr.mxu0 0.0
        %268 = vmatpush1.xpose.msra.mxu0 0.0
        %269 = vmatprep.subr.mxu0 0.0
        %270 = vmatpush1.xpose.msra.mxu0 0.0
        %271 = vmatprep.subr.mxu0 0.0
        %272 = vmatpush1.xpose.msra.mxu0 0.0
        %273 = vmatprep.subr.mxu0 0.0
        %274 = vmatpush1.xpose.msra.mxu0 0.0
        %275 = vmatprep.subr.mxu0 0.0
        %276 = vmatpush1.xpose.msra.mxu0 0.0
        %277 = vmatprep.subr.mxu0 0.0
        %278 = vmatpush1.xpose.msra.mxu0 0.0
        %279 = vmatprep.subr.mxu0 0.0
        %280 = vmatpush1.xpose.msra.mxu0 0.0
        %281 = vmatprep.subr.mxu0 0.0
        %282 = vmatpush1.xpose.msra.mxu0 0.0
        %283 = vmatprep.subr.mxu0 0.0
        %284 = vmatpush1.xpose.msra.mxu0 0.0
        %285 = vmatprep.subr.mxu0 0.0
        %286 = vmatpush1.xpose.msra.mxu0 0.0
        %287 = vmatprep.subr.mxu0 0.0
        %288 = vmatpush1.xpose.msra.mxu0 0.0
        %289 = vmatprep.subr.mxu0 0.0
        %290 = vmatpush1.xpose.msra.mxu0 0.0
        %291 = vmatprep.subr.mxu0 0.0
        %292 = vmatpush1.xpose.msra.mxu0 0.0
        %293 = vmatprep.subr.mxu0 0.0
        %294 = vmatpush1.xpose.msra.mxu0 0.0
        %295 = vmatprep.subr.mxu0 0.0
        %296 = vmatpush1.xpose.msra.mxu0 0.0
        %297 = vmatprep.subr.mxu0 0.0
        %298 = vmatpush1.xpose.msra.mxu0 0.0
        %299 = vmatprep.subr.mxu0 0.0
        %300 = vmatpush1.xpose.msra.mxu0 0.0
        %301 = vmatprep.subr.mxu0 0.0
        %302 = vmatpush1.xpose.msra.mxu0 0.0
        %303 = vmatprep.subr.mxu0 0.0
        %304 = vmatpush1.xpose.msra.mxu0 0.0
        %305 = vmatprep.subr.mxu0 0.0
        %306 = vmatpush1.xpose.msra.mxu0 0.0
        %307 = vmatprep.subr.mxu0 0.0
        %308 = vmatpush1.xpose.msra.mxu0 0.0
        %309 = vmatprep.subr.mxu0 0.0
        %310 = vmatpush1.xpose.msra.mxu0 0.0
        %311 = vmatprep.subr.mxu0 0.0
        %312 = vmatpush1.xpose.msra.mxu0 0.0
        %313 = vmatprep.subr.mxu0 0.0
        %314 = vmatpush1.xpose.msra.mxu0 0.0
        %315 = vmatprep.subr.mxu0 0.0
        %316 = vmatpush1.xpose.msra.mxu0 0.0
        %317 = vmatprep.subr.mxu0 0.0
        %318 = vmatpush1.xpose.msra.mxu0 0.0
        %319 = vmatprep.subr.mxu0 0.0
        %320 = vmatpush1.xpose.msra.mxu0 0.0
        %321 = vmatprep.subr.mxu0 0.0
        %322 = vmatpush1.xpose.msra.mxu0 0.0
        %323 = vmatprep.mubr.f32.mxu0 %v257
        %324 = vmatmul.mubr.f32.gmra.mrb[0].mxu0 %v254
        %v325 = vpop.f32.mrb[0].mxu0
        %v326 = vadd.f32 0.0, %v325
        %v327 = vpop.f32.mrb[0].mxu0
        %328 = vdwg.mxu0
        %v329 = vadd.f32 %v255, %v326
        %vm330 = vcmask 27648
        %331 = vst.msk [vmem:[#allocation2] sm:$0xf] %vm330, %v329
        // Predicated region
        $region41: #{tpu_custom_call.1} parent=27 // pred_check
          %p332 = pneg %p248
        $region42: #{tpu_custom_call.1} parent=27 // pred_check_branch
          %334 = sbr.rel (%p332) target = $region44
        $region43: #{tpu_custom_call.1} parent=27 // pred_region
          %v335 = vld [vmem:[#allocation2] sm:$0xf]
          %v336 = vmul.f32 %v335, 0.00390625
          %v337 = vld [vmem:[%s212] sm:$0xf]
          %v338 = vsub.f32 %v336, %v337
          %v339 = vmul.f32 %v338, %v338
          %v340 = vsel %vm330, %v339, 0.0
          %341 = vadd.xlane.f32.xlu0 %v340
          %v342 = vpop.xlane.xlu0 %341
          %v343 = vrot.slane %v342, 4
          %v344 = vadd.f32 %v342, %v343
          %v345 = vrot.slane %v344, 2
          %v346 = vadd.f32 %v344, %v345
          %v347 = vrot.slane %v346, 1
          %v348 = vadd.f32 %v346, %v347
          %s349 = vtos %v348
          %v350 = vstv %s349
          %vm351 = vcmask 0
          %352 = vst.msk [vmem:[%s244] sm:$0x1] %vm351, %v350
          %v353 = vand.u32 2147483647, %v338
          %v354 = vsel %vm330, %v353, 0.0
          %355 = vadd.xlane.f32.xlu0 %v354
          %v356 = vpop.xlane.xlu0 %355
          %v357 = vrot.slane %v356, 4
          %v358 = vadd.f32 %v356, %v357
          %v359 = vrot.slane %v358, 2
          %v360 = vadd.f32 %v358, %v359
          %v361 = vrot.slane %v360, 1
          %v362 = vadd.f32 %v360, %v361
          %s363 = vtos %v362
          %v364 = vstv %s363
          %365 = vst.msk [vmem:[%s247] sm:$0x1] %vm351, %v364
        $region44: #{tpu_custom_call.1} parent=27 // pred_fallthru
          _
        %p366 = scmp.lt.s32.totalorder %s25, 1
        %s367 = scalar_select %p366, %s25, 1
        %s368 = scalar_lea.vmem %s2, %s367
        %p369 = scmp.lt.s32.totalorder %s25, 1
        %s370 = scalar_select %p369, %s25, 1
        %s371 = scalar_lea.vmem %s3, %s370
        // Predicated region
        $region45: #{tpu_custom_call.1} parent=27 // pred_check
          %p372 = pneg %p105
        $region46: #{tpu_custom_call.1} parent=27 // pred_check_branch
          %374 = sbr.rel (%p372) target = $region48
        $region47: #{tpu_custom_call.1} parent=27 // pred_region
          _
        $region48: #{tpu_custom_call.1} parent=27 // pred_fallthru
          _
        // Predicated region
        $region49: #{tpu_custom_call.1} parent=27 // pred_check
          %p375 = pneg %p131
        $region50: #{tpu_custom_call.1} parent=27 // pred_check_branch
          %377 = sbr.rel (%p375) target = $region52
        $region51: #{tpu_custom_call.1} parent=27 // pred_region
          _
        $region52: #{tpu_custom_call.1} parent=27 // pred_fallthru
          _
      $region28: #{tpu_custom_call.1} parent=5 // pred_fallthru
        _
      %p378 = scmp.le.s32.totalorder 2, %s16
      // Predicated region
      $region53: #{tpu_custom_call.1} parent=5 // pred_check
        %p379 = pneg %p378
      $region54: #{tpu_custom_call.1} parent=5 // pred_check_branch
        %381 = sbr.rel (%p379) target = $region56
      $region55: #{tpu_custom_call.1} parent=5 // pred_region
        %s382 = ssub.s32 %s16, 2
        // Predicated region
        $region57: #{tpu_custom_call.1} parent=55 // pred_check
          %p383 = pneg %p111
        $region58: #{tpu_custom_call.1} parent=55 // pred_check_branch
          %385 = sbr.rel (%p383) target = $region60
        $region59: #{tpu_custom_call.1} parent=55 // pred_region
          %p386 = scmp.lt.s32.totalorder %s27, 1
          %s387 = scalar_select %p386, %s27, 1
          %s388 = scalar_lea.vmem %s2, %s387
        $region60: #{tpu_custom_call.1} parent=55 // pred_fallthru
          _
        // Predicated region
        $region61: #{tpu_custom_call.1} parent=55 // pred_check
          %p389 = pneg %p137
        $region62: #{tpu_custom_call.1} parent=55 // pred_check_branch
          %391 = sbr.rel (%p389) target = $region64
        $region63: #{tpu_custom_call.1} parent=55 // pred_region
          %p392 = scmp.lt.s32.totalorder %s27, 1
          %s393 = scalar_select %p392, %s27, 1
          %s394 = scalar_lea.vmem %s3, %s393
        $region64: #{tpu_custom_call.1} parent=55 // pred_fallthru
          _
      $region56: #{tpu_custom_call.1} parent=5 // pred_fallthru
        _
    $region6: #{tpu_custom_call.1} parent=1 // loop_footer
      %s20 = sadd.s32 1, %s16
    $region7: #{tpu_custom_call.1} parent=1 // loop_footer_branch
      %15 = sbr.rel target = $region3
    $region8: #{tpu_custom_call.1} parent=1 // loop_exit
      _
    %395 = vsyncpa [#allocation4], 1
    %s396 = scalar_lea.sflag [#allocation4], 1
    %397 = vsyncpa %s396, 1
    %398 = vsyncpa [#allocation6], 1
    %s399 = scalar_lea.sflag [#allocation6], 1
    %400 = vsyncpa %s399, 1

</llo_original>
